<compile_context>
chip_gen: v6e
topology: v6e:2x2x1
jax: 0.10.0
libtpu: 0.0.40
codegen_flags: <defaults>
</compile_context>

<pallas_src>
import numpy as np
import jax
import jax.numpy as jnp
from jax.experimental import pallas as pl
from jax.experimental.pallas import tpu as pltpu

# ---------------- static, deterministic network configuration ----------------
NET_DEPTH = 6                       # args.depth (synthetic choice)
NET_ARCH = [8] * NET_DEPTH          # net_arch (first NET_DEPTH entries)
LAYER_TC = [4] * NET_DEPTH          # layer_tc

OUT_DIMS = [NET_ARCH[0] + LAYER_TC[0]] + [8] * (NET_DEPTH - 2) + [2]   # [12,8,8,8,8,2]
IN_DIMS = [2] + [NET_ARCH[i] + LAYER_TC[i] for i in range(1, NET_DEPTH)]


def feat_width(k):                  # width of feat_dict[k] in the PyTorch forward
    return (NET_ARCH[0] + LAYER_TC[0]) if k == 0 else 8 * k + (NET_ARCH[0] + LAYER_TC[0])


# all_path_num[L] bounds the link indices drawn for layer L (they index feat_dict[L-2])
ALL_PATH_NUM = [feat_width(0), feat_width(0)] + [feat_width(L - 2) for L in range(2, NET_DEPTH)]

# deterministic replacement for random.sample in add_link()
_rs = np.random.RandomState(0)
LINKS = [list(np.sort(_rs.choice(ALL_PATH_NUM[i], size=LAYER_TC[i], replace=False)))
         for i in range(NET_DEPTH)]

SLAB_COLS = 128                     # weight-slab lane width (one lane tile, resident)
OUT_COLS = 8                        # lane-padded kernel output width (logical out = 2)

# contraction width consumed by each layer's single matmul:
#   layer 0 consumes x (2 cols); layers L>=1 consume the ReLU activation-slab prefix
K_DIMS = [IN_DIMS[0]] + [int(np.sum(OUT_DIMS[:L])) for L in range(1, NET_DEPTH)]  # [2,12,20,28,36,44]


def feat_layout(k):
    """Map a column index of feat_dict[k] -> (source out_dict index, column in that out)."""
    if k == 0:
        return [(0, c) for c in range(OUT_DIMS[0])]
    lay = []
    for s in range(k, 0, -1):                      # feat_dict[k] = cat(out_k, ..., out_1, out_0)
        lay += [(s, c) for c in range(OUT_DIMS[s])]
    lay += [(0, c) for c in range(OUT_DIMS[0])]
    return lay


def _round_up(n, m):
    return ((n + m - 1) // m) * m


# ------------------------------ parameters -----------------------------------
def init_params(key):
    Ws, bs = [], []
    for i in range(NET_DEPTH):
        key, k1, k2 = jax.random.split(key, 3)
        bound = 1.0 / np.sqrt(IN_DIMS[i])
        W = jax.random.uniform(k1, (OUT_DIMS[i], IN_DIMS[i]), jnp.float32, -bound, bound)
        b = jax.random.uniform(k2, (OUT_DIMS[i],), jnp.float32, -bound, bound)
        Ws.append(W)
        bs.append(b)
    return Ws, bs


def pack_params(Ws, bs):
    """Fold the static column-gathers into per-layer STACKED weights, split the
    FINAL layer into per-source blocks (so the kernel can accumulate the output
    on the fly), and pack everything into one (ROWS, 128) f32 slab (one DMA)."""
    stacked = []

    # layer 0: x (2 cols) @ W0.T -> (2, 12); x is NOT lane-padded anymore
    stacked.append(np.asarray(Ws[0]).T.astype(np.float32))            # (2, 12)
    # layer 1: input is just out0 (already ReLU'd) -> W1.T, shape (12, 8)
    stacked.append(np.asarray(Ws[1]).T.astype(np.float32))

    # layers 2..D-2: fold the concat + link-gather into per-source blocks, then
    # stack them vertically in activation-slab order [out0 | out1 | ... | out_{L-1}]
    for L in range(2, NET_DEPTH - 1):
        WT = np.asarray(Ws[L]).T.astype(np.float32)                   # (8 + tc_L, out_f)
        out_f = OUT_DIMS[L]
        blocks = [np.zeros((OUT_DIMS[s], out_f), np.float32) for s in range(L)]
        blocks[L - 1][:, :] = WT[:OUT_DIMS[L - 1], :]                 # direct prefix out_{L-1}
        lay = feat_layout(L - 2)
        for j in range(LAYER_TC[L]):                                  # scattered link columns
            s, col = lay[LINKS[L][j]]
            blocks[s][col, :] += WT[OUT_DIMS[L - 1] + j, :]
        stacked.append(np.concatenate(blocks, axis=0))                # (K_DIMS[L], out_f)

    # final layer: per-source blocks kept SEPARATE (padded to OUT_COLS columns);
    # the kernel folds out_s @ block_s into a running accumulator as out_s appears.
    Lf = NET_DEPTH - 1
    WT = np.asarray(Ws[Lf]).T.astype(np.float32)                      # (8 + tc, 2)
    fin_blocks = [np.zeros((OUT_DIMS[s], OUT_COLS), np.float32) for s in range(Lf)]
    fin_blocks[Lf - 1][:, :OUT_DIMS[Lf]] = WT[:OUT_DIMS[Lf - 1], :]   # direct prefix out_{Lf-1}
    lay = feat_layout(Lf - 2)
    for j in range(LAYER_TC[Lf]):
        s, col = lay[LINKS[Lf][j]]
        fin_blocks[s][col, :OUT_DIMS[Lf]] += WT[OUT_DIMS[Lf - 1] + j, :]

    # assemble the single slab: every block starts at an 8-aligned row offset
    rows, r = [], 0

    def push(blk):
        nonlocal r
        off = r
        kpad = _round_up(blk.shape[0], 8)
        padded = np.zeros((kpad, SLAB_COLS), np.float32)
        padded[:blk.shape[0], :blk.shape[1]] = blk
        rows.append(padded)
        r += kpad
        return off

    wk_off = tuple(push(blk) for blk in stacked)          # layers 0..D-2 stacked weights
    wf_off = tuple(push(blk) for blk in fin_blocks)       # final layer, per-source blocks
    b_off = r
    bias_blk = np.zeros((8, SLAB_COLS), np.float32)       # row L holds b_L (zero-padded)
    for L in range(NET_DEPTH):
        bias_blk[L, :OUT_DIMS[L]] = np.asarray(bs[L])
    rows.append(bias_blk)
    slab = np.concatenate(rows, axis=0)                   # (ROWS, 128)
    return jnp.asarray(slab), wk_off, wf_off, b_off


# ------------------------------ Pallas kernel --------------------------------
def make_kernel(wk_off, wf_off, b_off):
    def kernel(x_ref, p_ref, o_ref, relu_ref):
        Lf = NET_DEPTH - 1

        # layer 0: (tile_b, 2) x (2, 12) + bias, ReLU once, cache in the ReLU slab
        w0 = p_ref[wk_off[0]:wk_off[0] + K_DIMS[0], 0:OUT_DIMS[0]]
        b0 = p_ref[b_off:b_off + 1, 0:OUT_DIMS[0]]
        out0 = jnp.maximum(
            jnp.dot(x_ref[...], w0, preferred_element_type=jnp.float32) + b0, 0.0)
        relu_ref[:, 0:OUT_DIMS[0]] = out0                 # out0 is already ReLU'd

        # the final layer is linear in the RAW outs -> fold it into a running
        # accumulator (no raw scratch slab, no wide reload at the end)
        wf0 = p_ref[wf_off[0]:wf_off[0] + OUT_DIMS[0], 0:OUT_COLS]
        bf = p_ref[b_off + Lf:b_off + Lf + 1, 0:OUT_COLS]
        o_acc = jnp.dot(out0, wf0, preferred_element_type=jnp.float32) + bf

        # layers 1 .. D-2: ONE matmul each against the cached ReLU activation slab
        col = OUT_DIMS[0]
        for L in range(1, NET_DEPTH - 1):
            wL = p_ref[wk_off[L]:wk_off[L] + K_DIMS[L], 0:OUT_DIMS[L]]
            bL = p_ref[b_off + L:b_off + L + 1, 0:OUT_DIMS[L]]
            h = relu_ref[:, 0:K_DIMS[L]]
            outL = jnp.dot(h, wL, preferred_element_type=jnp.float32) + bL   # raw out_L
            # fold this raw out into the final-layer output
            wfL = p_ref[wf_off[L]:wf_off[L] + OUT_DIMS[L], 0:OUT_COLS]
            o_acc = o_acc + jnp.dot(outL, wfL, preferred_element_type=jnp.float32)
            if L < NET_DEPTH - 2:     # ReLU computed once, cached only if a later layer needs it
                relu_ref[:, col:col + OUT_DIMS[L]] = jnp.maximum(outL, 0.0)
            col += OUT_DIMS[L]

        o_ref[...] = o_acc            # dense (tile_b, 8) store; wrapper slices to (:, :2)
    return kernel


def choose_tiling(B):
    """Largest batch tile (<= 2048, multiple of 8) with <= ~10% padding waste,
    preferring >= 2 grid steps so both v7x TensorCores get work."""
    b8 = _round_up(max(B, 1), 8)
    cand = [t for t in (2048, 1024, 512, 256, 128, 64, 32, 16, 8) if t <= b8]
    if not cand:
        return 8, 8

    def waste_ok(t):
        b_pad = _round_up(b8, t)
        return (b_pad - b8) * 10 <= b_pad

    for t in cand:                                   # pass 1: low waste AND >= 2 tiles
        if waste_ok(t) and _round_up(b8, t) // t >= 2:
            return t, _round_up(b8, t)
    for t in cand:                                   # pass 2: low waste
        if waste_ok(t):
            return t, _round_up(b8, t)
    return cand[-1], _round_up(b8, cand[-1])         # fallback: smallest tile


def forward_pallas(x, slab, wk_off, wf_off, b_off):
    B, F = x.shape
    tile_b, b_pad = choose_tiling(B)
    x = x.astype(jnp.float32)
    xp = x if b_pad == B else jnp.pad(x, ((0, b_pad - B), (0, 0)))
    rows = slab.shape[0]

    # advisory cost hint: tiny flops per row, kernel is HBM-IO bound
    flops_per_row = 2 * sum(K_DIMS[L] * OUT_DIMS[L] for L in range(NET_DEPTH))
    cost = pl.CostEstimate(
        flops=int(flops_per_row * b_pad),
        transcendentals=0,
        bytes_accessed=int(4 * (b_pad * (F + OUT_COLS) + rows * SLAB_COLS)))

    out = pl.pallas_call(
        make_kernel(wk_off, wf_off, b_off),
        out_shape=jax.ShapeDtypeStruct((b_pad, OUT_COLS), jnp.float32),
        grid_spec=pltpu.PrefetchScalarGridSpec(
            num_scalar_prefetch=0,
            grid=(b_pad // tile_b,),
            in_specs=[pl.BlockSpec((tile_b, F), lambda i: (i, 0)),        # x, natural 2 cols
                      pl.BlockSpec((rows, SLAB_COLS), lambda i: (0, 0))], # weight slab resident
            out_specs=pl.BlockSpec((tile_b, OUT_COLS), lambda i: (i, 0)),
            scratch_shapes=[pltpu.VMEM((tile_b, 128), jnp.float32)],      # ReLU activation slab
        ),
        compiler_params=pltpu.CompilerParams(
            dimension_semantics=("parallel",)),       # v7x: split batch tiles across 2 TCs
        cost_estimate=cost,
    )(xp, slab)
    return out[:B, :OUT_DIMS[-1]]


# --------------------------- pure-JAX reference -------------------------------
def ref_forward(x, Ws, bs):
    out0 = jax.nn.relu(x @ Ws[0].T + bs[0])
    out1 = out0 @ Ws[1].T + bs[1]
    out_dict = [out0, out1]
    feat_dict = [out0, jnp.concatenate([out1, out0], 1)]
    for li in range(NET_DEPTH - 2):
        L = li + 2
        in_features = feat_dict[li]
        if LAYER_TC[L] > 0:
            in_tmp = jnp.concatenate([out_dict[li + 1], in_features[:, np.array(LINKS[L])]], 1)
        else:
            in_tmp = out_dict[li + 1]
        if li < NET_DEPTH - 3:
            out_tmp = jax.nn.relu(in_tmp) @ Ws[L].T + bs[L]
        else:
            out_tmp = in_tmp @ Ws[L].T + bs[L]
        feat_dict.append(jnp.concatenate([out_tmp, feat_dict[li + 1]], 1))
        out_dict.append(out_tmp)
    return out_dict[NET_DEPTH - 1]


# ----------------------------------- main -------------------------------------
if __name__ == "__main__":
    key = jax.random.PRNGKey(0)
    key, kx = jax.random.split(key)
    B = 8
    x = jax.random.normal(kx, (B, 2), jnp.float32)

    Ws, bs = init_params(key)
    slab, wk_off, wf_off, b_off = pack_params(Ws, bs)

    y = forward_pallas(x, slab, wk_off, wf_off, b_off)
    y = jax.block_until_ready(y)

    y_ref = np.asarray(ref_forward(x, Ws, bs))
    assert y.shape == (B, 2)
    assert np.allclose(np.asarray(y), y_ref, atol=1e-4, rtol=1e-4), "mismatch vs reference"
    print("KERNEL_OK")
</pallas_src>

<mosaic_0001>
module attributes {stable_mosaic.version = 11 : i64} {
  func.func @kernel(%arg0: i32, %arg1: memref<8x2xf32, #tpu.memory_space<vmem>>, %arg2: memref<176x128xf32, #tpu.memory_space<vmem>>, %arg3: memref<8x8xf32, #tpu.memory_space<vmem>>, %arg4: memref<8x128xf32, #tpu.memory_space<vmem>>) attributes {dimension_semantics = [#tpu.dimension_semantics<parallel>], iteration_bounds = array<i64: 1>, scalar_prefetch = 0 : i64, scratch_operands = 1 : i64, tpu.core_type = #tpu.core_type<tc>, window_params = [{transform_indices = @transform_0, window_bounds = array<i64: 8, 2>}, {pipeline_mode = #tpu.pipeline_mode<synchronous>, transform_indices = @transform_1, window_bounds = array<i64: 176, 128>}, {transform_indices = @transform_2, window_bounds = array<i64: 8, 8>}]} {
    %c0 = arith.constant 0 : index
    %c0_0 = arith.constant 0 : index
    %0 = vector.load %arg2[%c0, %c0_0] : memref<176x128xf32, #tpu.memory_space<vmem>>, vector<2x12xf32>
    %c168 = arith.constant 168 : index
    %c0_1 = arith.constant 0 : index
    %1 = vector.load %arg2[%c168, %c0_1] : memref<176x128xf32, #tpu.memory_space<vmem>>, vector<1x12xf32>
    %c0_2 = arith.constant 0 : index
    %c0_3 = arith.constant 0 : index
    %2 = vector.load %arg1[%c0_2, %c0_3] : memref<8x2xf32, #tpu.memory_space<vmem>>, vector<8x2xf32>
    %cst = arith.constant dense<0.000000e+00> : vector<8x12xf32>
    %3 = tpu.matmul %2, %0, %cst {dimension_numbers = #tpu.dot_dimension_numbers<[1], [0], [0], [1], [0, 0, 1, 1], [], []>} : vector<8x2xf32>, vector<2x12xf32>, vector<8x12xf32> -> vector<8x12xf32>
    %4 = vector.broadcast %1 : vector<1x12xf32> to vector<8x12xf32>
    %5 = arith.addf %3, %4 : vector<8x12xf32>
    %cst_4 = arith.constant 0.000000e+00 : f32
    %6 = vector.broadcast %cst_4 : f32 to vector<8x12xf32>
    %7 = arith.maximumf %5, %6 : vector<8x12xf32>
    %c0_5 = arith.constant 0 : index
    %c0_6 = arith.constant 0 : index
    %8 = vector.load %arg4[%c0_5, %c0_6] : memref<8x128xf32, #tpu.memory_space<vmem>>, vector<8x12xf32>
    tpu.vector_store %arg4[%c0_5, %c0_6], %7 {strides = array<i32>} : memref<8x128xf32, #tpu.memory_space<vmem>>, vector<8x12xf32>,
    %c120 = arith.constant 120 : index
    %c0_7 = arith.constant 0 : index
    %9 = vector.load %arg2[%c120, %c0_7] : memref<176x128xf32, #tpu.memory_space<vmem>>, vector<12x8xf32>
    %c173 = arith.constant 173 : index
    %c0_8 = arith.constant 0 : index
    %10 = vector.load %arg2[%c173, %c0_8] : memref<176x128xf32, #tpu.memory_space<vmem>>, vector<1x8xf32>
    %cst_9 = arith.constant dense<0.000000e+00> : vector<8x8xf32>
    %11 = tpu.matmul %7, %9, %cst_9 {dimension_numbers = #tpu.dot_dimension_numbers<[1], [0], [0], [1], [0, 0, 1, 1], [], []>} : vector<8x12xf32>, vector<12x8xf32>, vector<8x8xf32> -> vector<8x8xf32>
    %12 = vector.broadcast %10 : vector<1x8xf32> to vector<8x8xf32>
    %13 = arith.addf %11, %12 : vector<8x8xf32>
    %c8 = arith.constant 8 : index
    %c0_10 = arith.constant 0 : index
    %14 = vector.load %arg2[%c8, %c0_10] : memref<176x128xf32, #tpu.memory_space<vmem>>, vector<12x8xf32>
    %c169 = arith.constant 169 : index
    %c0_11 = arith.constant 0 : index
    %15 = vector.load %arg2[%c169, %c0_11] : memref<176x128xf32, #tpu.memory_space<vmem>>, vector<1x8xf32>
    %c0_12 = arith.constant 0 : index
    %c0_13 = arith.constant 0 : index
    %16 = vector.load %arg4[%c0_12, %c0_13] : memref<8x128xf32, #tpu.memory_space<vmem>>, vector<8x12xf32>
    %cst_14 = arith.constant dense<0.000000e+00> : vector<8x8xf32>
    %17 = tpu.matmul %16, %14, %cst_14 {dimension_numbers = #tpu.dot_dimension_numbers<[1], [0], [0], [1], [0, 0, 1, 1], [], []>} : vector<8x12xf32>, vector<12x8xf32>, vector<8x8xf32> -> vector<8x8xf32>
    %18 = vector.broadcast %15 : vector<1x8xf32> to vector<8x8xf32>
    %19 = arith.addf %17, %18 : vector<8x8xf32>
    %c136 = arith.constant 136 : index
    %c0_15 = arith.constant 0 : index
    %20 = vector.load %arg2[%c136, %c0_15] : memref<176x128xf32, #tpu.memory_space<vmem>>, vector<8x8xf32>
    %cst_16 = arith.constant dense<0.000000e+00> : vector<8x8xf32>
    %21 = tpu.matmul %19, %20, %cst_16 {dimension_numbers = #tpu.dot_dimension_numbers<[1], [0], [0], [1], [0, 0, 1, 1], [], []>} : vector<8x8xf32>, vector<8x8xf32>, vector<8x8xf32> -> vector<8x8xf32>
    %22 = arith.addf %13, %21 : vector<8x8xf32>
    %cst_17 = arith.constant 0.000000e+00 : f32
    %23 = vector.broadcast %cst_17 : f32 to vector<8x8xf32>
    %24 = arith.maximumf %19, %23 : vector<8x8xf32>
    %c0_18 = arith.constant 0 : index
    %c12 = arith.constant 12 : index
    %25 = vector.load %arg4[%c0_18, %c12] : memref<8x128xf32, #tpu.memory_space<vmem>>, vector<8x8xf32>
    tpu.vector_store %arg4[%c0_18, %c12], %24 {strides = array<i32>} : memref<8x128xf32, #tpu.memory_space<vmem>>, vector<8x8xf32>,
    %c24 = arith.constant 24 : index
    %c0_19 = arith.constant 0 : index
    %26 = vector.load %arg2[%c24, %c0_19] : memref<176x128xf32, #tpu.memory_space<vmem>>, vector<20x8xf32>
    %c170 = arith.constant 170 : index
    %c0_20 = arith.constant 0 : index
    %27 = vector.load %arg2[%c170, %c0_20] : memref<176x128xf32, #tpu.memory_space<vmem>>, vector<1x8xf32>
    %c0_21 = arith.constant 0 : index
    %c0_22 = arith.constant 0 : index
    %28 = vector.load %arg4[%c0_21, %c0_22] : memref<8x128xf32, #tpu.memory_space<vmem>>, vector<8x20xf32>
    %cst_23 = arith.constant dense<0.000000e+00> : vector<8x8xf32>
    %29 = tpu.matmul %28, %26, %cst_23 {dimension_numbers = #tpu.dot_dimension_numbers<[1], [0], [0], [1], [0, 0, 1, 1], [], []>} : vector<8x20xf32>, vector<20x8xf32>, vector<8x8xf32> -> vector<8x8xf32>
    %30 = vector.broadcast %27 : vector<1x8xf32> to vector<8x8xf32>
    %31 = arith.addf %29, %30 : vector<8x8xf32>
    %c144 = arith.constant 144 : index
    %c0_24 = arith.constant 0 : index
    %32 = vector.load %arg2[%c144, %c0_24] : memref<176x128xf32, #tpu.memory_space<vmem>>, vector<8x8xf32>
    %cst_25 = arith.constant dense<0.000000e+00> : vector<8x8xf32>
    %33 = tpu.matmul %31, %32, %cst_25 {dimension_numbers = #tpu.dot_dimension_numbers<[1], [0], [0], [1], [0, 0, 1, 1], [], []>} : vector<8x8xf32>, vector<8x8xf32>, vector<8x8xf32> -> vector<8x8xf32>
    %34 = arith.addf %22, %33 : vector<8x8xf32>
    %cst_26 = arith.constant 0.000000e+00 : f32
    %35 = vector.broadcast %cst_26 : f32 to vector<8x8xf32>
    %36 = arith.maximumf %31, %35 : vector<8x8xf32>
    %c0_27 = arith.constant 0 : index
    %c20 = arith.constant 20 : index
    %37 = vector.load %arg4[%c0_27, %c20] : memref<8x128xf32, #tpu.memory_space<vmem>>, vector<8x8xf32>
    tpu.vector_store %arg4[%c0_27, %c20], %36 {strides = array<i32>} : memref<8x128xf32, #tpu.memory_space<vmem>>, vector<8x8xf32>,
    %c48 = arith.constant 48 : index
    %c0_28 = arith.constant 0 : index
    %38 = vector.load %arg2[%c48, %c0_28] : memref<176x128xf32, #tpu.memory_space<vmem>>, vector<28x8xf32>
    %c171 = arith.constant 171 : index
    %c0_29 = arith.constant 0 : index
    %39 = vector.load %arg2[%c171, %c0_29] : memref<176x128xf32, #tpu.memory_space<vmem>>, vector<1x8xf32>
    %c0_30 = arith.constant 0 : index
    %c0_31 = arith.constant 0 : index
    %40 = vector.load %arg4[%c0_30, %c0_31] : memref<8x128xf32, #tpu.memory_space<vmem>>, vector<8x28xf32>
    %cst_32 = arith.constant dense<0.000000e+00> : vector<8x8xf32>
    %41 = tpu.matmul %40, %38, %cst_32 {dimension_numbers = #tpu.dot_dimension_numbers<[1], [0], [0], [1], [0, 0, 1, 1], [], []>} : vector<8x28xf32>, vector<28x8xf32>, vector<8x8xf32> -> vector<8x8xf32>
    %42 = vector.broadcast %39 : vector<1x8xf32> to vector<8x8xf32>
    %43 = arith.addf %41, %42 : vector<8x8xf32>
    %c152 = arith.constant 152 : index
    %c0_33 = arith.constant 0 : index
    %44 = vector.load %arg2[%c152, %c0_33] : memref<176x128xf32, #tpu.memory_space<vmem>>, vector<8x8xf32>
    %cst_34 = arith.constant dense<0.000000e+00> : vector<8x8xf32>
    %45 = tpu.matmul %43, %44, %cst_34 {dimension_numbers = #tpu.dot_dimension_numbers<[1], [0], [0], [1], [0, 0, 1, 1], [], []>} : vector<8x8xf32>, vector<8x8xf32>, vector<8x8xf32> -> vector<8x8xf32>
    %46 = arith.addf %34, %45 : vector<8x8xf32>
    %cst_35 = arith.constant 0.000000e+00 : f32
    %47 = vector.broadcast %cst_35 : f32 to vector<8x8xf32>
    %48 = arith.maximumf %43, %47 : vector<8x8xf32>
    %c0_36 = arith.constant 0 : index
    %c28 = arith.constant 28 : index
    %49 = vector.load %arg4[%c0_36, %c28] : memref<8x128xf32, #tpu.memory_space<vmem>>, vector<8x8xf32>
    tpu.vector_store %arg4[%c0_36, %c28], %48 {strides = array<i32>} : memref<8x128xf32, #tpu.memory_space<vmem>>, vector<8x8xf32>,
    %c80 = arith.constant 80 : index
    %c0_37 = arith.constant 0 : index
    %50 = vector.load %arg2[%c80, %c0_37] : memref<176x128xf32, #tpu.memory_space<vmem>>, vector<36x8xf32>
    %c172 = arith.constant 172 : index
    %c0_38 = arith.constant 0 : index
    %51 = vector.load %arg2[%c172, %c0_38] : memref<176x128xf32, #tpu.memory_space<vmem>>, vector<1x8xf32>
    %c0_39 = arith.constant 0 : index
    %c0_40 = arith.constant 0 : index
    %52 = vector.load %arg4[%c0_39, %c0_40] : memref<8x128xf32, #tpu.memory_space<vmem>>, vector<8x36xf32>
    %cst_41 = arith.constant dense<0.000000e+00> : vector<8x8xf32>
    %53 = tpu.matmul %52, %50, %cst_41 {dimension_numbers = #tpu.dot_dimension_numbers<[1], [0], [0], [1], [0, 0, 1, 1], [], []>} : vector<8x36xf32>, vector<36x8xf32>, vector<8x8xf32> -> vector<8x8xf32>
    %54 = vector.broadcast %51 : vector<1x8xf32> to vector<8x8xf32>
    %55 = arith.addf %53, %54 : vector<8x8xf32>
    %c160 = arith.constant 160 : index
    %c0_42 = arith.constant 0 : index
    %56 = vector.load %arg2[%c160, %c0_42] : memref<176x128xf32, #tpu.memory_space<vmem>>, vector<8x8xf32>
    %cst_43 = arith.constant dense<0.000000e+00> : vector<8x8xf32>
    %57 = tpu.matmul %55, %56, %cst_43 {dimension_numbers = #tpu.dot_dimension_numbers<[1], [0], [0], [1], [0, 0, 1, 1], [], []>} : vector<8x8xf32>, vector<8x8xf32>, vector<8x8xf32> -> vector<8x8xf32>
    %58 = arith.addf %46, %57 : vector<8x8xf32>
    %c0_44 = arith.constant 0 : index
    %c0_45 = arith.constant 0 : index
    %59 = vector.load %arg3[%c0_44, %c0_45] : memref<8x8xf32, #tpu.memory_space<vmem>>, vector<8x8xf32>
    tpu.vector_store %arg3[%c0_44, %c0_45], %58 {strides = array<i32>} : memref<8x8xf32, #tpu.memory_space<vmem>>, vector<8x8xf32>,
    return
  }
  func.func @transform_0(%arg0: i32) -> (i32, i32) {
    %c0_i32 = arith.constant 0 : i32
    %c0_i32_0 = arith.constant 0 : i32
    return %arg0, %c0_i32 : i32, i32
  }
  func.func @transform_1(%arg0: i32) -> (i32, i32) {
    %c0_i32 = arith.constant 0 : i32
    %c0_i32_0 = arith.constant 0 : i32
    %c0_i32_1 = arith.constant 0 : i32
    return %c0_i32, %c0_i32_0 : i32, i32
  }
  func.func @transform_2(%arg0: i32) -> (i32, i32) {
    %c0_i32 = arith.constant 0 : i32
    %c0_i32_0 = arith.constant 0 : i32
    return %arg0, %c0_i32 : i32, i32
  }
}

</mosaic_0001>

<llo_original>
// kernel: tpu_custom_call.1
$region0: #{tpu_custom_call.1}
  #allocation0 [shape = 'u32[]', space=smem, size = 0x4, offset = 0x4, fixed_abs, tag = 'smem constant byte address 0x4 - core index']
  #allocation1 [shape = 'u32[144,128]{1,0:T(1,128)}', space=vmem, size = 0x12000, scoped, tag = 'internal scratch']
  #allocation2 [shape = 'f32[8,128]{1,0:T(8,128)}', space=vmem, size = 0x1000, scoped, tag = 'scratch operand']
  %s0 = inlined_call_operand.vmem [shape: f32[8,2], index: 0, kind: input, shape index: {}]
  %s1 = inlined_call_operand.hbm [shape: f32[176,128], index: 1, kind: input, shape index: {}]
  %s2 = inlined_call_operand.hbm [shape: f32[8,8], index: 2, kind: output, shape index: {}]
  %s3 = sld [smem:[#allocation0]]
  $region22: #{tpu_custom_call.1} parent=0
    _
  %s5 = ssub.s32 1, %s3
  %s6 = scalar_select 0, %s5, %s3
  $region1: #{tpu_custom_call.1} parent=0
    #allocation3 [shape = 'u8[90112]{0}', space=vmem, size = 0x16000, scoped, tag = 'input window, operand 1, single buffered']
    #allocation4 [shape = 's32[1]{0}', space=sflag, size = 0x4, scoped, tag = 'scoped memory for tpu_custom_call.1']
    #allocation5 [shape = 's32[1]{0}', space=sflag, size = 0x4, scoped, tag = 'scoped memory for tpu_custom_call.1']
    #allocation6 [shape = 'u8[4096]{0}', space=vmem, size = 0x1000, scoped, tag = 'output window, operand 0, single buffered']
    %7 = vsyncpa [#allocation4], 0
    %8 = vsyncpa [#allocation5], 0
    // Predicated region
    $region2: #{tpu_custom_call.1} parent=1 // pred_check
      _
    $region3: #{tpu_custom_call.1} parent=1 // pred_check_branch
      %10 = sbr.rel (0) target = $region5
    $region4: #{tpu_custom_call.1} parent=1 // pred_region
      _
    $region5: #{tpu_custom_call.1} parent=1 // pred_fallthru
      _
    // Predicated region
    $region6: #{tpu_custom_call.1} parent=1 // pred_check
      _
    $region7: #{tpu_custom_call.1} parent=1 // pred_check_branch
      %12 = sbr.rel (0) target = $region9
    $region8: #{tpu_custom_call.1} parent=1 // pred_region
      %s14 = ssub.s32 2816, 2816
      %15 = vsyncadd [#allocation4], %s14
      %s16 = sshll.u32 [#allocation3], 4
      %s17 = int_to_ptr.vmem [resolvable:$true] %s16
      %22 = dma.hbm_to_vmem [thread:$0]  %s1, 2816, %s17, [#allocation4], 128, 128, 8
    $region9: #{tpu_custom_call.1} parent=1 // pred_fallthru
      _
    // Predicated region
    $region10: #{tpu_custom_call.1} parent=1 // pred_check
      _
    $region11: #{tpu_custom_call.1} parent=1 // pred_check_branch
      %24 = sbr.rel (0) target = $region13
    $region12: #{tpu_custom_call.1} parent=1 // pred_region
      %25 = dma.done [#allocation4], 2816
    $region13: #{tpu_custom_call.1} parent=1 // pred_fallthru
      _
    %v26 = vld [vmem:[#allocation3] sm:$0x3]
    %v27 = vld [vmem:[#allocation3 + $0xa8] sm:$0x1]
    %v28 = vld [vmem:[%s0] sm:$0xff]
    %v29 = vlaneseq
    %v30 = vshrl.u32 %v29, 7
    %v31 = vsub.s32 0, %v30
    %v32 = vrot.slane %v27, %v31
    %vm33 = vcmask 15360
    %v35 = vsel %vm33, %v28, 0
    %vm37 = vcmask 1041408
    %v39 = vsel %vm37, %v26, 0
    %41 = vmatprep.subr.mxu0 0.0
    %42 = vmatpush1.msra.mxu0 0.0
    %43 = vmatprep.subr.mxu0 0.0
    %44 = vmatpush1.msra.mxu0 0.0
    %45 = vmatprep.subr.mxu0 0.0
    %46 = vmatpush1.msra.mxu0 0.0
    %47 = vmatprep.subr.mxu0 0.0
    %48 = vmatpush1.msra.mxu0 0.0
    %49 = vmatprep.subr.mxu0 0.0
    %50 = vmatpush1.msra.mxu0 0.0
    %51 = vmatprep.subr.mxu0 0.0
    %52 = vmatpush1.msra.mxu0 0.0
    %53 = vmatprep.subr.mxu0 0.0
    %54 = vmatpush1.msra.mxu0 0.0
    %55 = vmatprep.subr.mxu0 0.0
    %56 = vmatpush1.msra.mxu0 0.0
    %57 = vmatprep.subr.mxu0 0.0
    %58 = vmatpush1.msra.mxu0 0.0
    %59 = vmatprep.subr.mxu0 0.0
    %60 = vmatpush1.msra.mxu0 0.0
    %61 = vmatprep.subr.mxu0 0.0
    %62 = vmatpush1.msra.mxu0 0.0
    %63 = vmatprep.subr.mxu0 0.0
    %64 = vmatpush1.msra.mxu0 0.0
    %65 = vmatprep.subr.mxu0 0.0
    %66 = vmatpush1.msra.mxu0 0.0
    %67 = vmatprep.subr.mxu0 0.0
    %68 = vmatpush1.msra.mxu0 0.0
    %69 = vmatprep.subr.mxu0 0.0
    %70 = vmatpush1.msra.mxu0 0.0
    %71 = vmatprep.subr.mxu0 0.0
    %72 = vmatpush1.msra.mxu0 %v39
    %73 = vmatprep.subr.mxu0 0.0
    %74 = vmatpush2.msra.mxu0 0.0
    %75 = vmatprep.subr.mxu0 0.0
    %76 = vmatpush2.msra.mxu0 0.0
    %77 = vmatprep.subr.mxu0 0.0
    %78 = vmatpush2.msra.mxu0 0.0
    %79 = vmatprep.subr.mxu0 0.0
    %80 = vmatpush2.msra.mxu0 0.0
    %81 = vmatprep.subr.mxu0 0.0
    %82 = vmatpush2.msra.mxu0 0.0
    %83 = vmatprep.subr.mxu0 0.0
    %84 = vmatpush2.msra.mxu0 0.0
    %85 = vmatprep.subr.mxu0 0.0
    %86 = vmatpush2.msra.mxu0 0.0
    %87 = vmatprep.subr.mxu0 0.0
    %88 = vmatpush2.msra.mxu0 0.0
    %89 = vmatprep.subr.mxu0 0.0
    %90 = vmatpush2.msra.mxu0 0.0
    %91 = vmatprep.subr.mxu0 0.0
    %92 = vmatpush2.msra.mxu0 0.0
    %93 = vmatprep.subr.mxu0 0.0
    %94 = vmatpush2.msra.mxu0 0.0
    %95 = vmatprep.subr.mxu0 0.0
    %96 = vmatpush2.msra.mxu0 0.0
    %97 = vmatprep.subr.mxu0 0.0
    %98 = vmatpush2.msra.mxu0 0.0
    %99 = vmatprep.subr.mxu0 0.0
    %100 = vmatpush2.msra.mxu0 0.0
    %101 = vmatprep.subr.mxu0 0.0
    %102 = vmatpush2.msra.mxu0 0.0
    %103 = vmatprep.subr.mxu0 0.0
    %104 = vmatpush2.msra.mxu0 0.0
    %105 = vmatprep.mubr.f32.mxu0 0.0
    %106 = vmatmul.mubr.f32.gmra.mxu0 %v35
    %v107 = vpop.f32.mrf.mxu0
    %v108 = vadd.f32 %v32, %v107
    %v109 = vpop.f32.mrf.mxu0
    %110 = vdwg.mxu0
    %v111 = vmax.f32 %v108, 0.0
    %vm112 = vcmask 97280
    %113 = vst.msk [vmem:[#allocation2] sm:$0xff] %vm112, %v111
    %v114 = vld [vmem:[#allocation3 + $0x78] sm:$0xff]
    %v115 = vld [vmem:[#allocation3 + $0x80] sm:$0xf]
    %v116 = vld [vmem:[#allocation3 + $0xad] sm:$0x1]
    %v117 = vlaneseq
    %v118 = vshrl.u32 %v117, 7
    %v119 = vsub.s32 0, %v118
    %v120 = vrot.slane %v116, %v119
    %v122 = vsel %vm112, %v111, 0
    %vm124 = vcmask 1043456
    %v126 = vsel %vm124, %v115, 0
    %128 = vmatprep.subr.mxu0 0.0
    %129 = vmatpush1.msra.mxu0 0.0
    %130 = vmatprep.subr.mxu0 0.0
    %131 = vmatpush1.msra.mxu0 0.0
    %132 = vmatprep.subr.mxu0 0.0
    %133 = vmatpush1.msra.mxu0 0.0
    %134 = vmatprep.subr.mxu0 0.0
    %135 = vmatpush1.msra.mxu0 0.0
    %136 = vmatprep.subr.mxu0 0.0
    %137 = vmatpush1.msra.mxu0 0.0
    %138 = vmatprep.subr.mxu0 0.0
    %139 = vmatpush1.msra.mxu0 0.0
    %140 = vmatprep.subr.mxu0 0.0
    %141 = vmatpush1.msra.mxu0 0.0
    %142 = vmatprep.subr.mxu0 0.0
    %143 = vmatpush1.msra.mxu0 0.0
    %144 = vmatprep.subr.mxu0 0.0
    %145 = vmatpush1.msra.mxu0 0.0
    %146 = vmatprep.subr.mxu0 0.0
    %147 = vmatpush1.msra.mxu0 0.0
    %148 = vmatprep.subr.mxu0 0.0
    %149 = vmatpush1.msra.mxu0 0.0
    %150 = vmatprep.subr.mxu0 0.0
    %151 = vmatpush1.msra.mxu0 0.0
    %152 = vmatprep.subr.mxu0 0.0
    %153 = vmatpush1.msra.mxu0 0.0
    %154 = vmatprep.subr.mxu0 0.0
    %155 = vmatpush1.msra.mxu0 0.0
    %156 = vmatprep.subr.mxu0 0.0
    %157 = vmatpush1.msra.mxu0 %v126
    %158 = vmatprep.subr.mxu0 0.0
    %159 = vmatpush1.msra.mxu0 %v114
    %160 = vmatprep.subr.mxu0 0.0
    %161 = vmatpush2.msra.mxu0 0.0
    %162 = vmatprep.subr.mxu0 0.0
    %163 = vmatpush2.msra.mxu0 0.0
    %164 = vmatprep.subr.mxu0 0.0
    %165 = vmatpush2.msra.mxu0 0.0
    %166 = vmatprep.subr.mxu0 0.0
    %167 = vmatpush2.msra.mxu0 0.0
    %168 = vmatprep.subr.mxu0 0.0
    %169 = vmatpush2.msra.mxu0 0.0
    %170 = vmatprep.subr.mxu0 0.0
    %171 = vmatpush2.msra.mxu0 0.0
    %172 = vmatprep.subr.mxu0 0.0
    %173 = vmatpush2.msra.mxu0 0.0
    %174 = vmatprep.subr.mxu0 0.0
    %175 = vmatpush2.msra.mxu0 0.0
    %176 = vmatprep.subr.mxu0 0.0
    %177 = vmatpush2.msra.mxu0 0.0
    %178 = vmatprep.subr.mxu0 0.0
    %179 = vmatpush2.msra.mxu0 0.0
    %180 = vmatprep.subr.mxu0 0.0
    %181 = vmatpush2.msra.mxu0 0.0
    %182 = vmatprep.subr.mxu0 0.0
    %183 = vmatpush2.msra.mxu0 0.0
    %184 = vmatprep.subr.mxu0 0.0
    %185 = vmatpush2.msra.mxu0 0.0
    %186 = vmatprep.subr.mxu0 0.0
    %187 = vmatpush2.msra.mxu0 0.0
    %188 = vmatprep.subr.mxu0 0.0
    %189 = vmatpush2.msra.mxu0 0.0
    %190 = vmatprep.subr.mxu0 0.0
    %191 = vmatpush2.msra.mxu0 0.0
    %192 = vmatprep.mubr.f32.mxu0 0.0
    %193 = vmatmul.mubr.f32.gmra.mxu0 %v122
    %v194 = vpop.f32.mrf.mxu0
    %v195 = vadd.f32 %v120, %v194
    %v196 = vpop.f32.mrf.mxu0
    %197 = vdwg.mxu0
    %v198 = vld [vmem:[#allocation3 + $0x8] sm:$0xff]
    %v199 = vld [vmem:[#allocation3 + $0x10] sm:$0xf]
    %v200 = vld [vmem:[#allocation3 + $0xa9] sm:$0x1]
    %v201 = vld [vmem:[#allocation2] sm:$0xff]
    %v202 = vlaneseq
    %v203 = vshrl.u32 %v202, 7
    %v204 = vsub.s32 0, %v203
    %v205 = vrot.slane %v200, %v204
    %v207 = vsel %vm112, %v201, 0
    %v210 = vsel %vm124, %v199, 0
    %212 = vmatprep.subr.mxu0 0.0
    %213 = vmatpush1.msra.mxu0 0.0
    %214 = vmatprep.subr.mxu0 0.0
    %215 = vmatpush1.msra.mxu0 0.0
    %216 = vmatprep.subr.mxu0 0.0
    %217 = vmatpush1.msra.mxu0 0.0
    %218 = vmatprep.subr.mxu0 0.0
    %219 = vmatpush1.msra.mxu0 0.0
    %220 = vmatprep.subr.mxu0 0.0
    %221 = vmatpush1.msra.mxu0 0.0
    %222 = vmatprep.subr.mxu0 0.0
    %223 = vmatpush1.msra.mxu0 0.0
    %224 = vmatprep.subr.mxu0 0.0
    %225 = vmatpush1.msra.mxu0 0.0
    %226 = vmatprep.subr.mxu0 0.0
    %227 = vmatpush1.msra.mxu0 0.0
    %228 = vmatprep.subr.mxu0 0.0
    %229 = vmatpush1.msra.mxu0 0.0
    %230 = vmatprep.subr.mxu0 0.0
    %231 = vmatpush1.msra.mxu0 0.0
    %232 = vmatprep.subr.mxu0 0.0
    %233 = vmatpush1.msra.mxu0 0.0
    %234 = vmatprep.subr.mxu0 0.0
    %235 = vmatpush1.msra.mxu0 0.0
    %236 = vmatprep.subr.mxu0 0.0
    %237 = vmatpush1.msra.mxu0 0.0
    %238 = vmatprep.subr.mxu0 0.0
    %239 = vmatpush1.msra.mxu0 0.0
    %240 = vmatprep.subr.mxu0 0.0
    %241 = vmatpush1.msra.mxu0 %v210
    %242 = vmatprep.subr.mxu0 0.0
    %243 = vmatpush1.msra.mxu0 %v198
    %244 = vmatprep.subr.mxu0 0.0
    %245 = vmatpush2.msra.mxu0 0.0
    %246 = vmatprep.subr.mxu0 0.0
    %247 = vmatpush2.msra.mxu0 0.0
    %248 = vmatprep.subr.mxu0 0.0
    %249 = vmatpush2.msra.mxu0 0.0
    %250 = vmatprep.subr.mxu0 0.0
    %251 = vmatpush2.msra.mxu0 0.0
    %252 = vmatprep.subr.mxu0 0.0
    %253 = vmatpush2.msra.mxu0 0.0
    %254 = vmatprep.subr.mxu0 0.0
    %255 = vmatpush2.msra.mxu0 0.0
    %256 = vmatprep.subr.mxu0 0.0
    %257 = vmatpush2.msra.mxu0 0.0
    %258 = vmatprep.subr.mxu0 0.0
    %259 = vmatpush2.msra.mxu0 0.0
    %260 = vmatprep.subr.mxu0 0.0
    %261 = vmatpush2.msra.mxu0 0.0
    %262 = vmatprep.subr.mxu0 0.0
    %263 = vmatpush2.msra.mxu0 0.0
    %264 = vmatprep.subr.mxu0 0.0
    %265 = vmatpush2.msra.mxu0 0.0
    %266 = vmatprep.subr.mxu0 0.0
    %267 = vmatpush2.msra.mxu0 0.0
    %268 = vmatprep.subr.mxu0 0.0
    %269 = vmatpush2.msra.mxu0 0.0
    %270 = vmatprep.subr.mxu0 0.0
    %271 = vmatpush2.msra.mxu0 0.0
    %272 = vmatprep.subr.mxu0 0.0
    %273 = vmatpush2.msra.mxu0 0.0
    %274 = vmatprep.subr.mxu0 0.0
    %275 = vmatpush2.msra.mxu0 0.0
    %276 = vmatprep.mubr.f32.mxu0 0.0
    %277 = vmatmul.mubr.f32.gmra.mxu0 %v207
    %v278 = vpop.f32.mrf.mxu0
    %v279 = vadd.f32 %v205, %v278
    %v280 = vpop.f32.mrf.mxu0
    %281 = vdwg.mxu0
    %v282 = vld [vmem:[#allocation3 + $0x88] sm:$0xff]
    %vm283 = vcmask 64512
    %v285 = vsel %vm283, %v279, 0
    %287 = vmatprep.subr.mxu0 0.0
    %288 = vmatpush1.msra.mxu0 0.0
    %289 = vmatprep.subr.mxu0 0.0
    %290 = vmatpush1.msra.mxu0 0.0
    %291 = vmatprep.subr.mxu0 0.0
    %292 = vmatpush1.msra.mxu0 0.0
    %293 = vmatprep.subr.mxu0 0.0
    %294 = vmatpush1.msra.mxu0 0.0
    %295 = vmatprep.subr.mxu0 0.0
    %296 = vmatpush1.msra.mxu0 0.0
    %297 = vmatprep.subr.mxu0 0.0
    %298 = vmatpush1.msra.mxu0 0.0
    %299 = vmatprep.subr.mxu0 0.0
    %300 = vmatpush1.msra.mxu0 0.0
    %301 = vmatprep.subr.mxu0 0.0
    %302 = vmatpush1.msra.mxu0 0.0
    %303 = vmatprep.subr.mxu0 0.0
    %304 = vmatpush1.msra.mxu0 0.0
    %305 = vmatprep.subr.mxu0 0.0
    %306 = vmatpush1.msra.mxu0 0.0
    %307 = vmatprep.subr.mxu0 0.0
    %308 = vmatpush1.msra.mxu0 0.0
    %309 = vmatprep.subr.mxu0 0.0
    %310 = vmatpush1.msra.mxu0 0.0
    %311 = vmatprep.subr.mxu0 0.0
    %312 = vmatpush1.msra.mxu0 0.0
    %313 = vmatprep.subr.mxu0 0.0
    %314 = vmatpush1.msra.mxu0 0.0
    %315 = vmatprep.subr.mxu0 0.0
    %316 = vmatpush1.msra.mxu0 0.0
    %317 = vmatprep.subr.mxu0 0.0
    %318 = vmatpush1.msra.mxu0 %v282
    %319 = vmatprep.subr.mxu0 0.0
    %320 = vmatpush2.msra.mxu0 0.0
    %321 = vmatprep.subr.mxu0 0.0
    %322 = vmatpush2.msra.mxu0 0.0
    %323 = vmatprep.subr.mxu0 0.0
    %324 = vmatpush2.msra.mxu0 0.0
    %325 = vmatprep.subr.mxu0 0.0
    %326 = vmatpush2.msra.mxu0 0.0
    %327 = vmatprep.subr.mxu0 0.0
    %328 = vmatpush2.msra.mxu0 0.0
    %329 = vmatprep.subr.mxu0 0.0
    %330 = vmatpush2.msra.mxu0 0.0
    %331 = vmatprep.subr.mxu0 0.0
    %332 = vmatpush2.msra.mxu0 0.0
    %333 = vmatprep.subr.mxu0 0.0
    %334 = vmatpush2.msra.mxu0 0.0
    %335 = vmatprep.subr.mxu0 0.0
    %336 = vmatpush2.msra.mxu0 0.0
    %337 = vmatprep.subr.mxu0 0.0
    %338 = vmatpush2.msra.mxu0 0.0
    %339 = vmatprep.subr.mxu0 0.0
    %340 = vmatpush2.msra.mxu0 0.0
    %341 = vmatprep.subr.mxu0 0.0
    %342 = vmatpush2.msra.mxu0 0.0
    %343 = vmatprep.subr.mxu0 0.0
    %344 = vmatpush2.msra.mxu0 0.0
    %345 = vmatprep.subr.mxu0 0.0
    %346 = vmatpush2.msra.mxu0 0.0
    %347 = vmatprep.subr.mxu0 0.0
    %348 = vmatpush2.msra.mxu0 0.0
    %349 = vmatprep.subr.mxu0 0.0
    %350 = vmatpush2.msra.mxu0 0.0
    %351 = vmatprep.mubr.f32.mxu0 0.0
    %352 = vmatmul.mubr.f32.gmra.mxu0 %v285
    %v353 = vpop.f32.mrf.mxu0
    %v354 = vadd.f32 0.0, %v353
    %v355 = vpop.f32.mrf.mxu0
    %356 = vdwg.mxu0
    %v357 = vadd.f32 %v195, %v354
    %v358 = vmax.f32 %v279, 0.0
    %360 = vrot.lane.b32.xlu0 %v358, 12
    %v361 = vpop.permute.xlu0 %360
    %vm363 = vcmask 162912
    %364 = vst.msk [vmem:[#allocation2] sm:$0xff] %vm363, %v361
    %v365 = vld [vmem:[#allocation3 + $0x18] sm:$0xff]
    %v366 = vld [vmem:[#allocation3 + $0x20] sm:$0xff]
    %v367 = vld [vmem:[#allocation3 + $0x28] sm:$0xf]
    %v368 = vld [vmem:[#allocation3 + $0xaa] sm:$0x1]
    %v369 = vld [vmem:[#allocation2] sm:$0xff]
    %v370 = vlaneseq
    %v371 = vshrl.u32 %v370, 7
    %v372 = vsub.s32 0, %v371
    %v373 = vrot.slane %v368, %v372
    %vm374 = vcmask 162816
    %v376 = vsel %vm374, %v369, 0
    %v379 = vsel %vm124, %v367, 0
    %381 = vmatprep.subr.mxu0 0.0
    %382 = vmatpush1.msra.mxu0 0.0
    %383 = vmatprep.subr.mxu0 0.0
    %384 = vmatpush1.msra.mxu0 0.0
    %385 = vmatprep.subr.mxu0 0.0
    %386 = vmatpush1.msra.mxu0 0.0
    %387 = vmatprep.subr.mxu0 0.0
    %388 = vmatpush1.msra.mxu0 0.0
    %389 = vmatprep.subr.mxu0 0.0
    %390 = vmatpush1.msra.mxu0 0.0
    %391 = vmatprep.subr.mxu0 0.0
    %392 = vmatpush1.msra.mxu0 0.0
    %393 = vmatprep.subr.mxu0 0.0
    %394 = vmatpush1.msra.mxu0 0.0
    %395 = vmatprep.subr.mxu0 0.0
    %396 = vmatpush1.msra.mxu0 0.0
    %397 = vmatprep.subr.mxu0 0.0
    %398 = vmatpush1.msra.mxu0 0.0
    %399 = vmatprep.subr.mxu0 0.0
    %400 = vmatpush1.msra.mxu0 0.0
    %401 = vmatprep.subr.mxu0 0.0
    %402 = vmatpush1.msra.mxu0 0.0
    %403 = vmatprep.subr.mxu0 0.0
    %404 = vmatpush1.msra.mxu0 0.0
    %405 = vmatprep.subr.mxu0 0.0
    %406 = vmatpush1.msra.mxu0 0.0
    %407 = vmatprep.subr.mxu0 0.0
    %408 = vmatpush1.msra.mxu0 %v379
    %409 = vmatprep.subr.mxu0 0.0
    %410 = vmatpush1.msra.mxu0 %v366
    %411 = vmatprep.subr.mxu0 0.0
    %412 = vmatpush1.msra.mxu0 %v365
    %413 = vmatprep.subr.mxu0 0.0
    %414 = vmatpush2.msra.mxu0 0.0
    %415 = vmatprep.subr.mxu0 0.0
    %416 = vmatpush2.msra.mxu0 0.0
    %417 = vmatprep.subr.mxu0 0.0
    %418 = vmatpush2.msra.mxu0 0.0
    %419 = vmatprep.subr.mxu0 0.0
    %420 = vmatpush2.msra.mxu0 0.0
    %421 = vmatprep.subr.mxu0 0.0
    %422 = vmatpush2.msra.mxu0 0.0
    %423 = vmatprep.subr.mxu0 0.0
    %424 = vmatpush2.msra.mxu0 0.0
    %425 = vmatprep.subr.mxu0 0.0
    %426 = vmatpush2.msra.mxu0 0.0
    %427 = vmatprep.subr.mxu0 0.0
    %428 = vmatpush2.msra.mxu0 0.0
    %429 = vmatprep.subr.mxu0 0.0
    %430 = vmatpush2.msra.mxu0 0.0
    %431 = vmatprep.subr.mxu0 0.0
    %432 = vmatpush2.msra.mxu0 0.0
    %433 = vmatprep.subr.mxu0 0.0
    %434 = vmatpush2.msra.mxu0 0.0
    %435 = vmatprep.subr.mxu0 0.0
    %436 = vmatpush2.msra.mxu0 0.0
    %437 = vmatprep.subr.mxu0 0.0
    %438 = vmatpush2.msra.mxu0 0.0
    %439 = vmatprep.subr.mxu0 0.0
    %440 = vmatpush2.msra.mxu0 0.0
    %441 = vmatprep.subr.mxu0 0.0
    %442 = vmatpush2.msra.mxu0 0.0
    %443 = vmatprep.subr.mxu0 0.0
    %444 = vmatpush2.msra.mxu0 0.0
    %445 = vmatprep.mubr.f32.mxu0 0.0
    %446 = vmatmul.mubr.f32.gmra.mxu0 %v376
    %v447 = vpop.f32.mrf.mxu0
    %v448 = vadd.f32 %v373, %v447
    %v449 = vpop.f32.mrf.mxu0
    %450 = vdwg.mxu0
    %v451 = vld [vmem:[#allocation3 + $0x90] sm:$0xff]
    %v453 = vsel %vm283, %v448, 0
    %455 = vmatprep.subr.mxu0 0.0
    %456 = vmatpush1.msra.mxu0 0.0
    %457 = vmatprep.subr.mxu0 0.0
    %458 = vmatpush1.msra.mxu0 0.0
    %459 = vmatprep.subr.mxu0 0.0
    %460 = vmatpush1.msra.mxu0 0.0
    %461 = vmatprep.subr.mxu0 0.0
    %462 = vmatpush1.msra.mxu0 0.0
    %463 = vmatprep.subr.mxu0 0.0
    %464 = vmatpush1.msra.mxu0 0.0
    %465 = vmatprep.subr.mxu0 0.0
    %466 = vmatpush1.msra.mxu0 0.0
    %467 = vmatprep.subr.mxu0 0.0
    %468 = vmatpush1.msra.mxu0 0.0
    %469 = vmatprep.subr.mxu0 0.0
    %470 = vmatpush1.msra.mxu0 0.0
    %471 = vmatprep.subr.mxu0 0.0
    %472 = vmatpush1.msra.mxu0 0.0
    %473 = vmatprep.subr.mxu0 0.0
    %474 = vmatpush1.msra.mxu0 0.0
    %475 = vmatprep.subr.mxu0 0.0
    %476 = vmatpush1.msra.mxu0 0.0
    %477 = vmatprep.subr.mxu0 0.0
    %478 = vmatpush1.msra.mxu0 0.0
    %479 = vmatprep.subr.mxu0 0.0
    %480 = vmatpush1.msra.mxu0 0.0
    %481 = vmatprep.subr.mxu0 0.0
    %482 = vmatpush1.msra.mxu0 0.0
    %483 = vmatprep.subr.mxu0 0.0
    %484 = vmatpush1.msra.mxu0 0.0
    %485 = vmatprep.subr.mxu0 0.0
    %486 = vmatpush1.msra.mxu0 %v451
    %487 = vmatprep.subr.mxu0 0.0
    %488 = vmatpush2.msra.mxu0 0.0
    %489 = vmatprep.subr.mxu0 0.0
    %490 = vmatpush2.msra.mxu0 0.0
    %491 = vmatprep.subr.mxu0 0.0
    %492 = vmatpush2.msra.mxu0 0.0
    %493 = vmatprep.subr.mxu0 0.0
    %494 = vmatpush2.msra.mxu0 0.0
    %495 = vmatprep.subr.mxu0 0.0
    %496 = vmatpush2.msra.mxu0 0.0
    %497 = vmatprep.subr.mxu0 0.0
    %498 = vmatpush2.msra.mxu0 0.0
    %499 = vmatprep.subr.mxu0 0.0
    %500 = vmatpush2.msra.mxu0 0.0
    %501 = vmatprep.subr.mxu0 0.0
    %502 = vmatpush2.msra.mxu0 0.0
    %503 = vmatprep.subr.mxu0 0.0
    %504 = vmatpush2.msra.mxu0 0.0
    %505 = vmatprep.subr.mxu0 0.0
    %506 = vmatpush2.msra.mxu0 0.0
    %507 = vmatprep.subr.mxu0 0.0
    %508 = vmatpush2.msra.mxu0 0.0
    %509 = vmatprep.subr.mxu0 0.0
    %510 = vmatpush2.msra.mxu0 0.0
    %511 = vmatprep.subr.mxu0 0.0
    %512 = vmatpush2.msra.mxu0 0.0
    %513 = vmatprep.subr.mxu0 0.0
    %514 = vmatpush2.msra.mxu0 0.0
    %515 = vmatprep.subr.mxu0 0.0
    %516 = vmatpush2.msra.mxu0 0.0
    %517 = vmatprep.subr.mxu0 0.0
    %518 = vmatpush2.msra.mxu0 0.0
    %519 = vmatprep.mubr.f32.mxu0 0.0
    %520 = vmatmul.mubr.f32.gmra.mxu0 %v453
    %v521 = vpop.f32.mrf.mxu0
    %v522 = vadd.f32 0.0, %v521
    %v523 = vpop.f32.mrf.mxu0
    %524 = vdwg.mxu0
    %v525 = vadd.f32 %v357, %v522
    %v526 = vmax.f32 %v448, 0.0
    %528 = vrot.lane.b32.xlu0 %v526, 20
    %v529 = vpop.permute.xlu0 %528
    %vm531 = vcmask 228512
    %532 = vst.msk [vmem:[#allocation2] sm:$0xff] %vm531, %v529
    %v533 = vld [vmem:[#allocation3 + $0x30] sm:$0xff]
    %v534 = vld [vmem:[#allocation3 + $0x38] sm:$0xff]
    %v535 = vld [vmem:[#allocation3 + $0x40] sm:$0xff]
    %v536 = vld [vmem:[#allocation3 + $0x48] sm:$0xf]
    %v537 = vld [vmem:[#allocation3 + $0xab] sm:$0x1]
    %v538 = vld [vmem:[#allocation2] sm:$0xff]
    %v539 = vlaneseq
    %v540 = vshrl.u32 %v539, 7
    %v541 = vsub.s32 0, %v540
    %v542 = vrot.slane %v537, %v541
    %vm543 = vcmask 228352
    %v545 = vsel %vm543, %v538, 0
    %v548 = vsel %vm124, %v536, 0
    %550 = vmatprep.subr.mxu0 0.0
    %551 = vmatpush1.msra.mxu0 0.0
    %552 = vmatprep.subr.mxu0 0.0
    %553 = vmatpush1.msra.mxu0 0.0
    %554 = vmatprep.subr.mxu0 0.0
    %555 = vmatpush1.msra.mxu0 0.0
    %556 = vmatprep.subr.mxu0 0.0
    %557 = vmatpush1.msra.mxu0 0.0
    %558 = vmatprep.subr.mxu0 0.0
    %559 = vmatpush1.msra.mxu0 0.0
    %560 = vmatprep.subr.mxu0 0.0
    %561 = vmatpush1.msra.mxu0 0.0
    %562 = vmatprep.subr.mxu0 0.0
    %563 = vmatpush1.msra.mxu0 0.0
    %564 = vmatprep.subr.mxu0 0.0
    %565 = vmatpush1.msra.mxu0 0.0
    %566 = vmatprep.subr.mxu0 0.0
    %567 = vmatpush1.msra.mxu0 0.0
    %568 = vmatprep.subr.mxu0 0.0
    %569 = vmatpush1.msra.mxu0 0.0
    %570 = vmatprep.subr.mxu0 0.0
    %571 = vmatpush1.msra.mxu0 0.0
    %572 = vmatprep.subr.mxu0 0.0
    %573 = vmatpush1.msra.mxu0 0.0
    %574 = vmatprep.subr.mxu0 0.0
    %575 = vmatpush1.msra.mxu0 %v548
    %576 = vmatprep.subr.mxu0 0.0
    %577 = vmatpush1.msra.mxu0 %v535
    %578 = vmatprep.subr.mxu0 0.0
    %579 = vmatpush1.msra.mxu0 %v534
    %580 = vmatprep.subr.mxu0 0.0
    %581 = vmatpush1.msra.mxu0 %v533
    %582 = vmatprep.subr.mxu0 0.0
    %583 = vmatpush2.msra.mxu0 0.0
    %584 = vmatprep.subr.mxu0 0.0
    %585 = vmatpush2.msra.mxu0 0.0
    %586 = vmatprep.subr.mxu0 0.0
    %587 = vmatpush2.msra.mxu0 0.0
    %588 = vmatprep.subr.mxu0 0.0
    %589 = vmatpush2.msra.mxu0 0.0
    %590 = vmatprep.subr.mxu0 0.0
    %591 = vmatpush2.msra.mxu0 0.0
    %592 = vmatprep.subr.mxu0 0.0
    %593 = vmatpush2.msra.mxu0 0.0
    %594 = vmatprep.subr.mxu0 0.0
    %595 = vmatpush2.msra.mxu0 0.0
    %596 = vmatprep.subr.mxu0 0.0
    %597 = vmatpush2.msra.mxu0 0.0
    %598 = vmatprep.subr.mxu0 0.0
    %599 = vmatpush2.msra.mxu0 0.0
    %600 = vmatprep.subr.mxu0 0.0
    %601 = vmatpush2.msra.mxu0 0.0
    %602 = vmatprep.subr.mxu0 0.0
    %603 = vmatpush2.msra.mxu0 0.0
    %604 = vmatprep.subr.mxu0 0.0
    %605 = vmatpush2.msra.mxu0 0.0
    %606 = vmatprep.subr.mxu0 0.0
    %607 = vmatpush2.msra.mxu0 0.0
    %608 = vmatprep.subr.mxu0 0.0
    %609 = vmatpush2.msra.mxu0 0.0
    %610 = vmatprep.subr.mxu0 0.0
    %611 = vmatpush2.msra.mxu0 0.0
    %612 = vmatprep.subr.mxu0 0.0
    %613 = vmatpush2.msra.mxu0 0.0
    %614 = vmatprep.mubr.f32.mxu0 0.0
    %615 = vmatmul.mubr.f32.gmra.mxu0 %v545
    %v616 = vpop.f32.mrf.mxu0
    %v617 = vadd.f32 %v542, %v616
    %v618 = vpop.f32.mrf.mxu0
    %619 = vdwg.mxu0
    %v620 = vld [vmem:[#allocation3 + $0x98] sm:$0xff]
    %v622 = vsel %vm283, %v617, 0
    %624 = vmatprep.subr.mxu0 0.0
    %625 = vmatpush1.msra.mxu0 0.0
    %626 = vmatprep.subr.mxu0 0.0
    %627 = vmatpush1.msra.mxu0 0.0
    %628 = vmatprep.subr.mxu0 0.0
    %629 = vmatpush1.msra.mxu0 0.0
    %630 = vmatprep.subr.mxu0 0.0
    %631 = vmatpush1.msra.mxu0 0.0
    %632 = vmatprep.subr.mxu0 0.0
    %633 = vmatpush1.msra.mxu0 0.0
    %634 = vmatprep.subr.mxu0 0.0
    %635 = vmatpush1.msra.mxu0 0.0
    %636 = vmatprep.subr.mxu0 0.0
    %637 = vmatpush1.msra.mxu0 0.0
    %638 = vmatprep.subr.mxu0 0.0
    %639 = vmatpush1.msra.mxu0 0.0
    %640 = vmatprep.subr.mxu0 0.0
    %641 = vmatpush1.msra.mxu0 0.0
    %642 = vmatprep.subr.mxu0 0.0
    %643 = vmatpush1.msra.mxu0 0.0
    %644 = vmatprep.subr.mxu0 0.0
    %645 = vmatpush1.msra.mxu0 0.0
    %646 = vmatprep.subr.mxu0 0.0
    %647 = vmatpush1.msra.mxu0 0.0
    %648 = vmatprep.subr.mxu0 0.0
    %649 = vmatpush1.msra.mxu0 0.0
    %650 = vmatprep.subr.mxu0 0.0
    %651 = vmatpush1.msra.mxu0 0.0
    %652 = vmatprep.subr.mxu0 0.0
    %653 = vmatpush1.msra.mxu0 0.0
    %654 = vmatprep.subr.mxu0 0.0
    %655 = vmatpush1.msra.mxu0 %v620
    %656 = vmatprep.subr.mxu0 0.0
    %657 = vmatpush2.msra.mxu0 0.0
    %658 = vmatprep.subr.mxu0 0.0
    %659 = vmatpush2.msra.mxu0 0.0
    %660 = vmatprep.subr.mxu0 0.0
    %661 = vmatpush2.msra.mxu0 0.0
    %662 = vmatprep.subr.mxu0 0.0
    %663 = vmatpush2.msra.mxu0 0.0
    %664 = vmatprep.subr.mxu0 0.0
    %665 = vmatpush2.msra.mxu0 0.0
    %666 = vmatprep.subr.mxu0 0.0
    %667 = vmatpush2.msra.mxu0 0.0
    %668 = vmatprep.subr.mxu0 0.0
    %669 = vmatpush2.msra.mxu0 0.0
    %670 = vmatprep.subr.mxu0 0.0
    %671 = vmatpush2.msra.mxu0 0.0
    %672 = vmatprep.subr.mxu0 0.0
    %673 = vmatpush2.msra.mxu0 0.0
    %674 = vmatprep.subr.mxu0 0.0
    %675 = vmatpush2.msra.mxu0 0.0
    %676 = vmatprep.subr.mxu0 0.0
    %677 = vmatpush2.msra.mxu0 0.0
    %678 = vmatprep.subr.mxu0 0.0
    %679 = vmatpush2.msra.mxu0 0.0
    %680 = vmatprep.subr.mxu0 0.0
    %681 = vmatpush2.msra.mxu0 0.0
    %682 = vmatprep.subr.mxu0 0.0
    %683 = vmatpush2.msra.mxu0 0.0
    %684 = vmatprep.subr.mxu0 0.0
    %685 = vmatpush2.msra.mxu0 0.0
    %686 = vmatprep.subr.mxu0 0.0
    %687 = vmatpush2.msra.mxu0 0.0
    %688 = vmatprep.mubr.f32.mxu0 0.0
    %689 = vmatmul.mubr.f32.gmra.mxu0 %v622
    %v690 = vpop.f32.mrf.mxu0
    %v691 = vadd.f32 0.0, %v690
    %v692 = vpop.f32.mrf.mxu0
    %693 = vdwg.mxu0
    %v694 = vadd.f32 %v525, %v691
    %v695 = vmax.f32 %v617, 0.0
    %697 = vrot.lane.b32.xlu0 %v695, 28
    %v698 = vpop.permute.xlu0 %697
    %vm700 = vcmask 294112
    %701 = vst.msk [vmem:[#allocation2] sm:$0xff] %vm700, %v698
    %v702 = vld [vmem:[#allocation3 + $0x50] sm:$0xff]
    %v703 = vld [vmem:[#allocation3 + $0x58] sm:$0xff]
    %v704 = vld [vmem:[#allocation3 + $0x60] sm:$0xff]
    %v705 = vld [vmem:[#allocation3 + $0x68] sm:$0xff]
    %v706 = vld [vmem:[#allocation3 + $0x70] sm:$0xf]
    %v707 = vld [vmem:[#allocation3 + $0xac] sm:$0x1]
    %v708 = vld [vmem:[#allocation2] sm:$0xff]
    %v709 = vlaneseq
    %v710 = vshrl.u32 %v709, 7
    %v711 = vsub.s32 0, %v710
    %v712 = vrot.slane %v707, %v711
    %vm713 = vcmask 293888
    %v715 = vsel %vm713, %v708, 0
    %v718 = vsel %vm124, %v706, 0
    %720 = vmatprep.subr.mxu0 0.0
    %721 = vmatpush1.msra.mxu0 0.0
    %722 = vmatprep.subr.mxu0 0.0
    %723 = vmatpush1.msra.mxu0 0.0
    %724 = vmatprep.subr.mxu0 0.0
    %725 = vmatpush1.msra.mxu0 0.0
    %726 = vmatprep.subr.mxu0 0.0
    %727 = vmatpush1.msra.mxu0 0.0
    %728 = vmatprep.subr.mxu0 0.0
    %729 = vmatpush1.msra.mxu0 0.0
    %730 = vmatprep.subr.mxu0 0.0
    %731 = vmatpush1.msra.mxu0 0.0
    %732 = vmatprep.subr.mxu0 0.0
    %733 = vmatpush1.msra.mxu0 0.0
    %734 = vmatprep.subr.mxu0 0.0
    %735 = vmatpush1.msra.mxu0 0.0
    %736 = vmatprep.subr.mxu0 0.0
    %737 = vmatpush1.msra.mxu0 0.0
    %738 = vmatprep.subr.mxu0 0.0
    %739 = vmatpush1.msra.mxu0 0.0
    %740 = vmatprep.subr.mxu0 0.0
    %741 = vmatpush1.msra.mxu0 0.0
    %742 = vmatprep.subr.mxu0 0.0
    %743 = vmatpush1.msra.mxu0 %v718
    %744 = vmatprep.subr.mxu0 0.0
    %745 = vmatpush1.msra.mxu0 %v705
    %746 = vmatprep.subr.mxu0 0.0
    %747 = vmatpush1.msra.mxu0 %v704
    %748 = vmatprep.subr.mxu0 0.0
    %749 = vmatpush1.msra.mxu0 %v703
    %750 = vmatprep.subr.mxu0 0.0
    %751 = vmatpush1.msra.mxu0 %v702
    %752 = vmatprep.subr.mxu0 0.0
    %753 = vmatpush2.msra.mxu0 0.0
    %754 = vmatprep.subr.mxu0 0.0
    %755 = vmatpush2.msra.mxu0 0.0
    %756 = vmatprep.subr.mxu0 0.0
    %757 = vmatpush2.msra.mxu0 0.0
    %758 = vmatprep.subr.mxu0 0.0
    %759 = vmatpush2.msra.mxu0 0.0
    %760 = vmatprep.subr.mxu0 0.0
    %761 = vmatpush2.msra.mxu0 0.0
    %762 = vmatprep.subr.mxu0 0.0
    %763 = vmatpush2.msra.mxu0 0.0
    %764 = vmatprep.subr.mxu0 0.0
    %765 = vmatpush2.msra.mxu0 0.0
    %766 = vmatprep.subr.mxu0 0.0
    %767 = vmatpush2.msra.mxu0 0.0
    %768 = vmatprep.subr.mxu0 0.0
    %769 = vmatpush2.msra.mxu0 0.0
    %770 = vmatprep.subr.mxu0 0.0
    %771 = vmatpush2.msra.mxu0 0.0
    %772 = vmatprep.subr.mxu0 0.0
    %773 = vmatpush2.msra.mxu0 0.0
    %774 = vmatprep.subr.mxu0 0.0
    %775 = vmatpush2.msra.mxu0 0.0
    %776 = vmatprep.subr.mxu0 0.0
    %777 = vmatpush2.msra.mxu0 0.0
    %778 = vmatprep.subr.mxu0 0.0
    %779 = vmatpush2.msra.mxu0 0.0
    %780 = vmatprep.subr.mxu0 0.0
    %781 = vmatpush2.msra.mxu0 0.0
    %782 = vmatprep.subr.mxu0 0.0
    %783 = vmatpush2.msra.mxu0 0.0
    %784 = vmatprep.mubr.f32.mxu0 0.0
    %785 = vmatmul.mubr.f32.gmra.mxu0 %v715
    %v786 = vpop.f32.mrf.mxu0
    %v787 = vadd.f32 %v712, %v786
    %v788 = vpop.f32.mrf.mxu0
    %789 = vdwg.mxu0
    %v790 = vld [vmem:[#allocation3 + $0xa0] sm:$0xff]
    %v792 = vsel %vm283, %v787, 0
    %794 = vmatprep.subr.mxu0 0.0
    %795 = vmatpush1.msra.mxu0 0.0
    %796 = vmatprep.subr.mxu0 0.0
    %797 = vmatpush1.msra.mxu0 0.0
    %798 = vmatprep.subr.mxu0 0.0
    %799 = vmatpush1.msra.mxu0 0.0
    %800 = vmatprep.subr.mxu0 0.0
    %801 = vmatpush1.msra.mxu0 0.0
    %802 = vmatprep.subr.mxu0 0.0
    %803 = vmatpush1.msra.mxu0 0.0
    %804 = vmatprep.subr.mxu0 0.0
    %805 = vmatpush1.msra.mxu0 0.0
    %806 = vmatprep.subr.mxu0 0.0
    %807 = vmatpush1.msra.mxu0 0.0
    %808 = vmatprep.subr.mxu0 0.0
    %809 = vmatpush1.msra.mxu0 0.0
    %810 = vmatprep.subr.mxu0 0.0
    %811 = vmatpush1.msra.mxu0 0.0
    %812 = vmatprep.subr.mxu0 0.0
    %813 = vmatpush1.msra.mxu0 0.0
    %814 = vmatprep.subr.mxu0 0.0
    %815 = vmatpush1.msra.mxu0 0.0
    %816 = vmatprep.subr.mxu0 0.0
    %817 = vmatpush1.msra.mxu0 0.0
    %818 = vmatprep.subr.mxu0 0.0
    %819 = vmatpush1.msra.mxu0 0.0
    %820 = vmatprep.subr.mxu0 0.0
    %821 = vmatpush1.msra.mxu0 0.0
    %822 = vmatprep.subr.mxu0 0.0
    %823 = vmatpush1.msra.mxu0 0.0
    %824 = vmatprep.subr.mxu0 0.0
    %825 = vmatpush1.msra.mxu0 %v790
    %826 = vmatprep.subr.mxu0 0.0
    %827 = vmatpush2.msra.mxu0 0.0
    %828 = vmatprep.subr.mxu0 0.0
    %829 = vmatpush2.msra.mxu0 0.0
    %830 = vmatprep.subr.mxu0 0.0
    %831 = vmatpush2.msra.mxu0 0.0
    %832 = vmatprep.subr.mxu0 0.0
    %833 = vmatpush2.msra.mxu0 0.0
    %834 = vmatprep.subr.mxu0 0.0
    %835 = vmatpush2.msra.mxu0 0.0
    %836 = vmatprep.subr.mxu0 0.0
    %837 = vmatpush2.msra.mxu0 0.0
    %838 = vmatprep.subr.mxu0 0.0
    %839 = vmatpush2.msra.mxu0 0.0
    %840 = vmatprep.subr.mxu0 0.0
    %841 = vmatpush2.msra.mxu0 0.0
    %842 = vmatprep.subr.mxu0 0.0
    %843 = vmatpush2.msra.mxu0 0.0
    %844 = vmatprep.subr.mxu0 0.0
    %845 = vmatpush2.msra.mxu0 0.0
    %846 = vmatprep.subr.mxu0 0.0
    %847 = vmatpush2.msra.mxu0 0.0
    %848 = vmatprep.subr.mxu0 0.0
    %849 = vmatpush2.msra.mxu0 0.0
    %850 = vmatprep.subr.mxu0 0.0
    %851 = vmatpush2.msra.mxu0 0.0
    %852 = vmatprep.subr.mxu0 0.0
    %853 = vmatpush2.msra.mxu0 0.0
    %854 = vmatprep.subr.mxu0 0.0
    %855 = vmatpush2.msra.mxu0 0.0
    %856 = vmatprep.subr.mxu0 0.0
    %857 = vmatpush2.msra.mxu0 0.0
    %858 = vmatprep.mubr.f32.mxu0 0.0
    %859 = vmatmul.mubr.f32.gmra.mxu0 %v792
    %v860 = vpop.f32.mrf.mxu0
    %v861 = vadd.f32 0.0, %v860
    %v862 = vpop.f32.mrf.mxu0
    %863 = vdwg.mxu0
    %v864 = vadd.f32 %v694, %v861
    %865 = vst.msk [vmem:[#allocation6] sm:$0xff] %vm283, %v864
    // Predicated region
    $region14: #{tpu_custom_call.1} parent=1 // pred_check
      _
    $region15: #{tpu_custom_call.1} parent=1 // pred_check_branch
      %867 = sbr.rel (0) target = $region17
    $region16: #{tpu_custom_call.1} parent=1 // pred_region
      %s869 = ssub.s32 128, 128
      %870 = vsyncadd [#allocation5], %s869
      %s872 = sshll.u32 [#allocation6], 4
      %s873 = int_to_ptr.vmem [resolvable:$true] %s872
      %875 = dma.vmem_to_hbm [thread:$0]  %s873, 128, %s2, [#allocation5]
    $region17: #{tpu_custom_call.1} parent=1 // pred_fallthru
      _
    // Predicated region
    $region18: #{tpu_custom_call.1} parent=1 // pred_check
      _
    $region19: #{tpu_custom_call.1} parent=1 // pred_check_branch
      %877 = sbr.rel (0) target = $region21
    $region20: #{tpu_custom_call.1} parent=1 // pred_region
      %878 = dma.done [#allocation5], 128
    $region21: #{tpu_custom_call.1} parent=1 // pred_fallthru
      _
    %879 = vsyncpa [#allocation4], 1
    %880 = vsyncpa [#allocation5], 1

</llo_original>
